<compile_context>
chip_gen: v7x
topology: tpu7x:2x2x1
jax: 0.10.0
libtpu: 0.0.40
codegen_flags: <defaults>
</compile_context>

<pallas_src>
import functools

import jax
import jax.numpy as jnp
from jax.experimental import pallas as pl
from jax.experimental.pallas import tpu as pltpu


_NUM_CORES = 2            # leading "parallel" grid axis -> megacore-shardable on v7x
_LANE = 128
_SUBLANE = 8
_LANE_DENSE_MAX_C = 64    # batch-on-lanes layout while classes fit a few sublane rows
_VMEM_BUDGET = 16 * 1024 * 1024   # per-step double-buffered footprint target
_VMEM_LIMIT = 32 * 1024 * 1024    # scoped VMEM limit (valid on v5e/v6e/v7x physical)


def _cdiv(a, b):
    return -(-a // b)


def _round_up(x, m):
    return ((x + m - 1) // m) * m


def _pow_gamma(base, gamma, gamma_int):
    """(1-pt)**gamma with an integer fast path (exponentiation by squaring)."""
    if gamma_int is not None:
        p = gamma_int
        if p == 0:
            return jnp.ones_like(base)
        result = None
        b = base
        while p:
            if p & 1:
                result = b if result is None else result * b
            p >>= 1
            if p:
                b = b * b
        return result
    # Non-integer gamma: x**g = exp(g*log(x)); clamp so pt marginally > 1 cannot
    # NaN.  (PyTorch would produce NaN there -- intentional divergence.)
    base_c = jnp.maximum(base, 0.0)
    return jnp.where(base_c > 0.0,
                     jnp.exp(gamma * jnp.log(jnp.maximum(base_c, 1e-38))),
                     0.0)


# ----------------------------------------------------------------------------
# Lane-dense kernel: batch on lanes, classes on sublanes (small C).
# ----------------------------------------------------------------------------
def _focal_lane_kernel(logits_ref, targets_ref, w_ref, out_ref, *, gamma,
                       gamma_int):
    # logits_ref: (C, T)   targets_ref / w_ref: (1, T)   out_ref: (8, T)
    step = pl.program_id(1)

    @pl.when(step == 0)
    def _init():
        out_ref[...] = jnp.zeros_like(out_ref)

    logits = logits_ref[...].astype(jnp.float32)           # (C, T)
    t = targets_ref[...]                                    # (1, T) int32
    w = w_ref[...]                                          # (1, T) f32 (alpha/N, 0 on pads)

    # Numerically stable logsumexp over the class (sublane) axis.
    m = jnp.max(logits, axis=0, keepdims=True)              # (1, T)
    lse = m + jnp.log(jnp.sum(jnp.exp(logits - m), axis=0, keepdims=True))

    # One-hot gather of the target logit via a sublane (class) iota compare.
    cls = jax.lax.broadcasted_iota(jnp.int32, logits.shape, 0)
    picked = jnp.sum(logits * (cls == t).astype(jnp.float32),
                     axis=0, keepdims=True)                  # (1, T)

    ce = lse - picked                                        # (1, T)
    pt = jnp.exp(-ce)
    focal = w * _pow_gamma(1.0 - pt, gamma, gamma_int) * ce  # (1, T)

    # Elementwise (VPU) accumulate into the resident lane-dense per-core block;
    # the (1,T) row broadcasts over the 8 sublanes (all rows hold the same
    # partial sums).  The single cross-vreg reduction happens in the wrapper.
    out_ref[...] = out_ref[...] + focal


def _focal_loss_lane_dense(logits, targets, w, c, n, itemsize, gamma,
                           gamma_int):
    c_sub = _round_up(c, _SUBLANE)
    # Per lane-column VMEM bytes: double-buffered logits + targets + w, plus the
    # (8, T) output block (counted double-buffered for headroom).
    per_col = 2 * c_sub * itemsize + 3 * 2 * _SUBLANE * 4
    tile = (min(_VMEM_BUDGET // per_col, 32768) // _LANE) * _LANE
    tile = max(_LANE, tile)
    tile = min(tile, _round_up(max(_cdiv(n, _NUM_CORES), 1), _LANE))

    total_tiles = _cdiv(n, tile)
    spc = _cdiv(total_tiles, _NUM_CORES)          # steps per core
    n_pad = _NUM_CORES * spc * tile               # exact multiple -> no implicit block padding

    logits_t = jnp.pad(logits.T, ((0, 0), (0, n_pad - n)))
    targets_row = jnp.pad(targets.reshape(1, n), ((0, 0), (0, n_pad - n)))
    w_row = jnp.pad(w.reshape(1, n), ((0, 0), (0, n_pad - n)))

    kernel = functools.partial(_focal_lane_kernel, gamma=gamma,
                               gamma_int=gamma_int)
    col_map = lambda core, s: (0, core * spc + s)

    out = pl.pallas_call(
        kernel,
        out_shape=jax.ShapeDtypeStruct((_NUM_CORES * _SUBLANE, tile),
                                       jnp.float32),
        grid=(_NUM_CORES, spc),
        in_specs=[
            pl.BlockSpec((c, tile), col_map),     # logits (native dtype)
            pl.BlockSpec((1, tile), col_map),     # targets
            pl.BlockSpec((1, tile), col_map),     # per-row weights
        ],
        # One resident (8, tile) accumulator block per core.
        out_specs=pl.BlockSpec((_SUBLANE, tile), lambda core, s: (core, 0)),
        compiler_params=pltpu.CompilerParams(
            dimension_semantics=("parallel", "arbitrary"),
            vmem_limit_bytes=_VMEM_LIMIT),
    )(logits_t, targets_row, w_row)

    # Row 0 of each per-core block holds that core's per-column partial sums
    # (all 8 rows are identical); reduce once here.
    partial = out.reshape(_NUM_CORES, _SUBLANE, tile)[:, 0, :]
    return jnp.sum(partial)


# ----------------------------------------------------------------------------
# Row-major fallback kernel for large C (classes on lanes).
# ----------------------------------------------------------------------------
def _focal_rowmajor_kernel(logits_ref, targets_ref, w_ref, out_ref, acc_ref, *,
                           gamma, gamma_int):
    i = pl.program_id(0)

    @pl.when(i == 0)
    def _init():
        acc_ref[...] = jnp.zeros_like(acc_ref)

    logits = logits_ref[...].astype(jnp.float32)            # (TN, C)
    t = targets_ref[...]                                     # (TN, 1)
    w = w_ref[...]                                           # (TN, 1)

    m = jnp.max(logits, axis=-1, keepdims=True)
    lse = m + jnp.log(jnp.sum(jnp.exp(logits - m), axis=-1, keepdims=True))
    col = jax.lax.broadcasted_iota(jnp.int32, logits.shape, 1)
    picked = jnp.sum(logits * (col == t).astype(jnp.float32),
                     axis=-1, keepdims=True)

    ce = lse - picked
    pt = jnp.exp(-ce)
    focal = w * _pow_gamma(1.0 - pt, gamma, gamma_int) * ce   # (TN, 1)

    acc_ref[...] = acc_ref[...] + focal                       # elementwise (VPU) accumulate

    @pl.when(i == pl.num_programs(0) - 1)
    def _finalize():
        out_ref[...] = jnp.zeros_like(out_ref) + jnp.sum(acc_ref[...])


def _focal_loss_rowmajor(logits, targets, w, c, n, itemsize, gamma, gamma_int):
    # TODO(synk): class-axis tiling + online-softmax carry for vocab-scale C.
    c_lane = _round_up(c, _LANE)
    # Per-row VMEM bytes: double-buffered logits + lane-padded targets/w + scratch.
    per_row = 2 * c_lane * itemsize + 2 * 2 * _LANE * 4 + _LANE * 4
    tile_n = (min(_VMEM_BUDGET // per_row, 4096) // _SUBLANE) * _SUBLANE
    tile_n = max(_SUBLANE, tile_n)
    tile_n = min(tile_n, _round_up(n, _SUBLANE))
    n_pad = _round_up(n, tile_n)                  # exact multiple -> no implicit padding

    logits_p = jnp.pad(logits, ((0, n_pad - n), (0, 0)))
    targets_p = jnp.pad(targets.reshape(n, 1), ((0, n_pad - n), (0, 0)))
    w_p = jnp.pad(w.reshape(n, 1), ((0, n_pad - n), (0, 0)))

    kernel = functools.partial(_focal_rowmajor_kernel, gamma=gamma,
                               gamma_int=gamma_int)
    out = pl.pallas_call(
        kernel,
        out_shape=jax.ShapeDtypeStruct((1, 1), jnp.float32),
        grid=(n_pad // tile_n,),
        in_specs=[
            pl.BlockSpec((tile_n, c), lambda i: (i, 0)),
            pl.BlockSpec((tile_n, 1), lambda i: (i, 0)),
            pl.BlockSpec((tile_n, 1), lambda i: (i, 0)),
        ],
        out_specs=pl.BlockSpec((1, 1), lambda i: (0, 0)),
        scratch_shapes=[pltpu.VMEM((tile_n, 1), jnp.float32)],
        compiler_params=pltpu.CompilerParams(
            dimension_semantics=("arbitrary",),
            vmem_limit_bytes=_VMEM_LIMIT),
    )(logits_p, targets_p, w_p)
    return out[0, 0]


# ----------------------------------------------------------------------------
# Public wrapper.
# ----------------------------------------------------------------------------
def focal_loss(logits, targets, alpha=None, gamma=2.0, reduction="mean"):
    """Pallas TPU implementation of FocalLoss.forward (reduction='mean'/'sum')."""
    if reduction not in ("mean", "sum"):
        # TODO(synk): reduction='none' (per-sample vector) not implemented.
        raise NotImplementedError("only reduction='mean'/'sum' implemented")
    n, c = logits.shape
    targets = targets.astype(jnp.int32)

    # Fold alpha gather, mean factor and pad masking into one per-row weight.
    scale = (1.0 / float(n)) if reduction == "mean" else 1.0
    if alpha is not None:
        alpha_arr = jnp.asarray(alpha, dtype=jnp.float32).reshape(-1)
        w = jnp.take(alpha_arr, targets, axis=0).astype(jnp.float32) * scale
    else:
        w = jnp.full((n,), scale, dtype=jnp.float32)
    # (pad rows appended later get weight exactly 0)

    gamma_f = float(gamma)
    gamma_int = (int(gamma_f)
                 if gamma_f.is_integer() and 0.0 <= gamma_f <= 16.0 else None)
    itemsize = jnp.dtype(logits.dtype).itemsize

    if c <= _LANE_DENSE_MAX_C:
        return _focal_loss_lane_dense(logits, targets, w, c, n, itemsize,
                                      gamma_f, gamma_int)
    return _focal_loss_rowmajor(logits, targets, w, c, n, itemsize,
                                gamma_f, gamma_int)


def _focal_loss_ref(logits, targets, alpha, gamma):
    # Pure-JAX reference for sanity checking (mean reduction).
    logits = logits.astype(jnp.float32)
    lse = jax.nn.logsumexp(logits, axis=-1)
    picked = jnp.take_along_axis(logits, targets[:, None], axis=-1)[:, 0]
    ce = lse - picked
    pt = jnp.exp(-ce)
    at = alpha[targets]
    return jnp.mean((1.0 - pt) ** gamma * (at * ce))


if __name__ == "__main__":
    key = jax.random.PRNGKey(0)
    k1, k2, k3, k4, k5, k6 = jax.random.split(key, 6)

    # Case 1: the shipped binary-classification configuration (alpha, gamma=2),
    # lane-dense path.
    N1, C1 = 8, 2
    logits1 = jax.random.normal(k1, (N1, C1), dtype=jnp.float32)
    targets1 = jax.random.randint(k2, (N1,), 0, C1, dtype=jnp.int32)
    alpha1 = jnp.array([1.0, 1.3], dtype=jnp.float32)

    loss1 = jax.block_until_ready(
        focal_loss(logits1, targets1, alpha=alpha1, gamma=2.0))
    ref1 = _focal_loss_ref(logits1, targets1, alpha1, 2.0)
    assert jnp.allclose(loss1, ref1, rtol=1e-5, atol=1e-6), (loss1, ref1)

    loss1s = jax.block_until_ready(
        focal_loss(logits1, targets1, alpha=alpha1, gamma=2.0, reduction="sum"))
    assert jnp.allclose(loss1s, ref1 * N1, rtol=1e-5, atol=1e-6), (loss1s, ref1 * N1)

    # Case 2: odd batch size, no alpha, non-integer gamma (exercises padding,
    # zero-weight pad columns and the exp/log modulation path).
    N2, C2 = 37, 5
    logits2 = jax.random.normal(k3, (N2, C2), dtype=jnp.float32)
    targets2 = jax.random.randint(k4, (N2,), 0, C2, dtype=jnp.int32)

    loss2 = jax.block_until_ready(
        focal_loss(logits2, targets2, alpha=None, gamma=1.7))
    ref2 = _focal_loss_ref(logits2, targets2, jnp.ones((C2,), jnp.float32), 1.7)
    assert jnp.allclose(loss2, ref2, rtol=1e-5, atol=1e-6), (loss2, ref2)

    # Case 3: large class count -> row-major fallback path.
    N3, C3 = 50, 130
    logits3 = jax.random.normal(k5, (N3, C3), dtype=jnp.float32)
    targets3 = jax.random.randint(k6, (N3,), 0, C3, dtype=jnp.int32)

    loss3 = jax.block_until_ready(
        focal_loss(logits3, targets3, alpha=None, gamma=2.0))
    ref3 = _focal_loss_ref(logits3, targets3, jnp.ones((C3,), jnp.float32), 2.0)
    assert jnp.allclose(loss3, ref3, rtol=1e-5, atol=1e-6), (loss3, ref3)

    print("KERNEL_OK")
</pallas_src>

<mosaic_0001>
module attributes {stable_mosaic.version = 11 : i64} {
  func.func @_focal_lane_kernel(%arg0: i32, %arg1: i32, %arg2: memref<2x128xf32, #tpu.memory_space<vmem>>, %arg3: memref<1x128xi32, #tpu.memory_space<vmem>>, %arg4: memref<1x128xf32, #tpu.memory_space<vmem>>, %arg5: memref<8x128xf32, #tpu.memory_space<vmem>>) attributes {dimension_semantics = [#tpu.dimension_semantics<parallel>, #tpu.dimension_semantics<arbitrary>], iteration_bounds = array<i64: 2, 1>, scalar_prefetch = 0 : i64, scratch_operands = 0 : i64, tpu.core_type = #tpu.core_type<tc>, window_params = [{transform_indices = @transform_0, window_bounds = array<i64: 2, 128>}, {transform_indices = @transform_1, window_bounds = array<i64: 1, 128>}, {transform_indices = @transform_2, window_bounds = array<i64: 1, 128>}, {transform_indices = @transform_3, window_bounds = array<i64: 8, 128>}]} {
    %c0_i32 = arith.constant 0 : i32
    %0 = arith.cmpi eq, %arg1, %c0_i32 : i32
    %1 = arith.extui %0 : i1 to i32
    %c0_i32_0 = arith.constant 0 : i32
    %2 = arith.cmpi ne, %1, %c0_i32_0 : i32
    scf.if %2 {
      %cst_14 = arith.constant 0.000000e+00 : f32
      %36 = vector.broadcast %cst_14 : f32 to vector<8x128xf32>
      %c0_15 = arith.constant 0 : index
      %c0_16 = arith.constant 0 : index
      %37 = vector.load %arg5[%c0_15, %c0_16] : memref<8x128xf32, #tpu.memory_space<vmem>>, vector<8x128xf32>
      tpu.vector_store %arg5[%c0_15, %c0_16], %36 {strides = array<i32>} : memref<8x128xf32, #tpu.memory_space<vmem>>, vector<8x128xf32>,
    } else {
    }
    %c0 = arith.constant 0 : index
    %c0_1 = arith.constant 0 : index
    %3 = vector.load %arg2[%c0, %c0_1] : memref<2x128xf32, #tpu.memory_space<vmem>>, vector<2x128xf32>
    %c0_2 = arith.constant 0 : index
    %c0_3 = arith.constant 0 : index
    %4 = vector.load %arg3[%c0_2, %c0_3] : memref<1x128xi32, #tpu.memory_space<vmem>>, vector<1x128xi32>
    %c0_4 = arith.constant 0 : index
    %c0_5 = arith.constant 0 : index
    %5 = vector.load %arg4[%c0_4, %c0_5] : memref<1x128xf32, #tpu.memory_space<vmem>>, vector<1x128xf32>
    %cst = arith.constant dense<0xFF800000> : vector<128xf32>
    %6 = vector.multi_reduction <maximumf>, %3, %cst [0] : vector<2x128xf32> to vector<128xf32>
    %7 = vector.shape_cast %6 : vector<128xf32> to vector<1x128xf32>
    %8 = vector.broadcast %7 : vector<1x128xf32> to vector<2x128xf32>
    %9 = arith.subf %3, %8 : vector<2x128xf32>
    %10 = math.exp %9 : vector<2x128xf32>
    %cst_6 = arith.constant dense<0.000000e+00> : vector<128xf32>
    %11 = vector.multi_reduction <add>, %10, %cst_6 [0] : vector<2x128xf32> to vector<128xf32>
    %12 = vector.shape_cast %11 : vector<128xf32> to vector<1x128xf32>
    %13 = math.log %12 : vector<1x128xf32>
    %14 = arith.addf %7, %13 : vector<1x128xf32>
    %15 = tpu.iota {dimensions = array<i32: 0>} : vector<2x128xi32>
    %16 = vector.broadcast %4 : vector<1x128xi32> to vector<2x128xi32>
    %17 = arith.cmpi eq, %15, %16 : vector<2x128xi32>
    %18 = arith.extui %17 : vector<2x128xi1> to vector<2x128xi32>
    %19 = arith.sitofp %18 : vector<2x128xi32> to vector<2x128xf32>
    %20 = arith.mulf %3, %19 : vector<2x128xf32>
    %cst_7 = arith.constant dense<0.000000e+00> : vector<128xf32>
    %21 = vector.multi_reduction <add>, %20, %cst_7 [0] : vector<2x128xf32> to vector<128xf32>
    %22 = vector.shape_cast %21 : vector<128xf32> to vector<1x128xf32>
    %23 = arith.subf %14, %22 : vector<1x128xf32>
    %cst_8 = arith.constant 0.000000e+00 : f32
    %24 = vector.broadcast %cst_8 : f32 to vector<1x128xf32>
    %25 = arith.subf %24, %23 : vector<1x128xf32>
    %26 = math.exp %25 : vector<1x128xf32>
    %cst_9 = arith.constant 1.000000e+00 : f32
    %27 = vector.broadcast %cst_9 : f32 to vector<1x128xf32>
    %28 = arith.subf %27, %26 : vector<1x128xf32>
    %29 = arith.mulf %28, %28 : vector<1x128xf32>
    %30 = arith.mulf %5, %29 : vector<1x128xf32>
    %31 = arith.mulf %30, %23 : vector<1x128xf32>
    %c0_10 = arith.constant 0 : index
    %c0_11 = arith.constant 0 : index
    %32 = vector.load %arg5[%c0_10, %c0_11] : memref<8x128xf32, #tpu.memory_space<vmem>>, vector<8x128xf32>
    %33 = vector.broadcast %31 : vector<1x128xf32> to vector<8x128xf32>
    %34 = arith.addf %32, %33 : vector<8x128xf32>
    %c0_12 = arith.constant 0 : index
    %c0_13 = arith.constant 0 : index
    %35 = vector.load %arg5[%c0_12, %c0_13] : memref<8x128xf32, #tpu.memory_space<vmem>>, vector<8x128xf32>
    tpu.vector_store %arg5[%c0_12, %c0_13], %34 {strides = array<i32>} : memref<8x128xf32, #tpu.memory_space<vmem>>, vector<8x128xf32>,
    return
  }
  func.func @transform_0(%arg0: i32, %arg1: i32) -> (i32, i32) {
    %c1_i32 = arith.constant 1 : i32
    %0 = arith.muli %arg0, %c1_i32 : i32
    %1 = arith.addi %0, %arg1 : i32
    %c0_i32 = arith.constant 0 : i32
    %c0_i32_0 = arith.constant 0 : i32
    return %c0_i32, %1 : i32, i32
  }
  func.func @transform_1(%arg0: i32, %arg1: i32) -> (i32, i32) {
    %c1_i32 = arith.constant 1 : i32
    %0 = arith.muli %arg0, %c1_i32 : i32
    %1 = arith.addi %0, %arg1 : i32
    %c0_i32 = arith.constant 0 : i32
    %c0_i32_0 = arith.constant 0 : i32
    return %c0_i32, %1 : i32, i32
  }
  func.func @transform_2(%arg0: i32, %arg1: i32) -> (i32, i32) {
    %c1_i32 = arith.constant 1 : i32
    %0 = arith.muli %arg0, %c1_i32 : i32
    %1 = arith.addi %0, %arg1 : i32
    %c0_i32 = arith.constant 0 : i32
    %c0_i32_0 = arith.constant 0 : i32
    return %c0_i32, %1 : i32, i32
  }
  func.func @transform_3(%arg0: i32, %arg1: i32) -> (i32, i32) {
    %c0_i32 = arith.constant 0 : i32
    %c0_i32_0 = arith.constant 0 : i32
    return %arg0, %c0_i32 : i32, i32
  }
}

</mosaic_0001>

<llo_original>
// kernel: tpu_custom_call.1
$region0: #{tpu_custom_call.1}
  #allocation0 [shape = 'u32[]', space=smem, size = 0x4, offset = 0x4, fixed_abs, tag = 'smem constant byte address 0x4 - core index']
  #allocation1 [shape = 'u32[144,128]{1,0:T(1,128)}', space=vmem, size = 0x12000, scoped, tag = 'internal scratch']
  %s0 = inlined_call_operand.hbm [shape: f32[2,256], index: 0, kind: input, shape index: {}]
  %s1 = inlined_call_operand.vmem [shape: s32[1,256], index: 1, kind: input, shape index: {}]
  %s2 = inlined_call_operand.vmem [shape: f32[1,256], index: 2, kind: input, shape index: {}]
  %s3 = inlined_call_operand.hbm [shape: f32[16,128], index: 3, kind: output, shape index: {}]
  %s4 = sld [smem:[#allocation0]]
  $region53: #{tpu_custom_call.1} parent=0
    _
  %s6 = ssub.s32 1, %s4
  %s7 = scalar_select 0, %s6, %s4
  $region1: #{tpu_custom_call.1} parent=0
    #allocation2 [shape = 'u8[2048]{0}', space=vmem, size = 0x800, scoped, tag = 'input window, operand 0']
    #allocation3 [shape = 's32[2]{0}', space=sflag, size = 0x8, scoped, tag = 'scoped memory for tpu_custom_call.1']
    #allocation4 [shape = 's32[2]{0}', space=sflag, size = 0x8, scoped, tag = 'scoped memory for tpu_custom_call.1']
    #allocation5 [shape = 'u8[8192]{0}', space=vmem, size = 0x2000, scoped, tag = 'output window, operand 0']
    %8 = vsyncpa [#allocation3], 0
    %s9 = scalar_lea.sflag [#allocation3], 1
    %10 = vsyncpa %s9, 0
    %11 = vsyncpa [#allocation4], 0
    %s12 = scalar_lea.sflag [#allocation4], 1
    %13 = vsyncpa %s12, 0
    loop: start=0, step=1, limit=4
    $region2: #{tpu_custom_call.1} parent=1 // loop_pre_header
      _
    $region3: #{tpu_custom_call.1} parent=1 // loop_header
      %s15 = sphi 0, %s19
      %p16 = scmp.ge.s32.totalorder %s15, 4
      %s22 = sphi 0, %s34
      %s23 = sphi 0, %s30
      %s24 = sphi 0, %s22
      %s25 = sphi 0, %s23
      %s26 = sphi 0, %s24
      %s27 = sphi 0, %s25
      %s39 = sphi 0, %s41
      %s42 = sphi 0, %s39
      %s43 = sphi 0, %s42
      %s59 = sphi 0, %s43
      %s67 = sphi 0, %s69
      %s70 = sphi 0, %s67
      %s71 = sphi 0, %s70
      %s87 = sphi 0, %s71
      %s95 = sphi 0, %s97
      %s98 = sphi 0, %s95
      %s99 = sphi 0, %s98
      %s115 = sphi 0, %s99
      %s121 = sphi 0, %s123
      %s124 = sphi 0, %s121
      %s125 = sphi 0, %s124
      %s141 = sphi 0, %s125
    $region4: #{tpu_custom_call.1} parent=1 // loop_header_branch
      %18 = sbr.rel (%p16) target = $region8
    $region5: #{tpu_custom_call.1} parent=1 // loop_body
      %s20 = ssub.s32 %s15, 1
      %s21 = ssub.s32 %s15, 2
      %s28 = sadd.s32 1, %s23
      %p29 = scmp.ge.s32.totalorder %s28, 1
      %s30 = scalar_select %p29, 0, %s28
      %s31 = sadd.s32 1, %s22
      %s32 = scalar_select %p29, %s31, %s22
      %p33 = scmp.ge.s32.totalorder %s32, 2
      %s34 = scalar_select %p33, 0, %s32
      %s35 = sadd.s32 %s22, %s23
      %s36 = sadd.s32 %s34, %s30
      %s37 = ssub.s32 %s35, %s36
      %p38 = scmp.eq.s32.totalorder %s37, 0
      %s40 = sadd.s32 %s39, 1
      %s41 = scalar_select %p38, %s39, %s40
      %p44 = pneg %p38
      %p45 = scmp.eq.s32.totalorder %s15, 1
      %p46 = por %p44, %p45
      %p47 = scmp.ne.s32.totalorder %s39, %s42
      %p48 = scmp.eq.s32.totalorder %s15, 0
      %p49 = por %p47, %p48
      %p50 = scmp.ne.s32.totalorder %s39, %s42
      %p51 = scmp.eq.s32.totalorder %s20, 1
      %p52 = por %p50, %p51
      %p53 = scmp.ne.s32.totalorder %s42, %s43
      %p54 = scmp.eq.s32.totalorder %s20, 0
      %p55 = por %p53, %p54
      %p56 = scmp.ne.s32.totalorder %s42, %s43
      %p57 = scmp.eq.s32.totalorder %s21, 1
      %p58 = por %p56, %p57
      %p60 = scmp.ne.s32.totalorder %s43, %s59
      %p61 = scmp.eq.s32.totalorder %s21, 0
      %p62 = por %p60, %p61
      %s63 = sadd.s32 %s22, %s23
      %s64 = sadd.s32 %s34, %s30
      %s65 = ssub.s32 %s63, %s64
      %p66 = scmp.eq.s32.totalorder %s65, 0
      %s68 = sadd.s32 %s67, 1
      %s69 = scalar_select %p66, %s67, %s68
      %p72 = pneg %p66
      %p73 = scmp.eq.s32.totalorder %s15, 1
      %p74 = por %p72, %p73
      %p75 = scmp.ne.s32.totalorder %s67, %s70
      %p76 = scmp.eq.s32.totalorder %s15, 0
      %p77 = por %p75, %p76
      %p78 = scmp.ne.s32.totalorder %s67, %s70
      %p79 = scmp.eq.s32.totalorder %s20, 1
      %p80 = por %p78, %p79
      %p81 = scmp.ne.s32.totalorder %s70, %s71
      %p82 = scmp.eq.s32.totalorder %s20, 0
      %p83 = por %p81, %p82
      %p84 = scmp.ne.s32.totalorder %s70, %s71
      %p85 = scmp.eq.s32.totalorder %s21, 1
      %p86 = por %p84, %p85
      %p88 = scmp.ne.s32.totalorder %s71, %s87
      %p89 = scmp.eq.s32.totalorder %s21, 0
      %p90 = por %p88, %p89
      %s91 = sadd.s32 %s22, %s23
      %s92 = sadd.s32 %s34, %s30
      %s93 = ssub.s32 %s91, %s92
      %p94 = scmp.eq.s32.totalorder %s93, 0
      %s96 = sadd.s32 %s95, 1
      %s97 = scalar_select %p94, %s95, %s96
      %p100 = pneg %p94
      %p101 = scmp.eq.s32.totalorder %s15, 1
      %p102 = por %p100, %p101
      %p103 = scmp.ne.s32.totalorder %s95, %s98
      %p104 = scmp.eq.s32.totalorder %s15, 0
      %p105 = por %p103, %p104
      %p106 = scmp.ne.s32.totalorder %s95, %s98
      %p107 = scmp.eq.s32.totalorder %s20, 1
      %p108 = por %p106, %p107
      %p109 = scmp.ne.s32.totalorder %s98, %s99
      %p110 = scmp.eq.s32.totalorder %s20, 0
      %p111 = por %p109, %p110
      %p112 = scmp.ne.s32.totalorder %s98, %s99
      %p113 = scmp.eq.s32.totalorder %s21, 1
      %p114 = por %p112, %p113
      %p116 = scmp.ne.s32.totalorder %s99, %s115
      %p117 = scmp.eq.s32.totalorder %s21, 0
      %p118 = por %p116, %p117
      %s119 = ssub.s32 %s22, %s34
      %p120 = scmp.eq.s32.totalorder %s119, 0
      %s122 = sadd.s32 %s121, 1
      %s123 = scalar_select %p120, %s121, %s122
      %p126 = pneg %p120
      %p127 = scmp.eq.s32.totalorder %s15, 1
      %p128 = por %p126, %p127
      %p129 = scmp.ne.s32.totalorder %s121, %s124
      %p130 = scmp.eq.s32.totalorder %s15, 0
      %p131 = por %p129, %p130
      %p132 = scmp.ne.s32.totalorder %s121, %s124
      %p133 = scmp.eq.s32.totalorder %s20, 1
      %p134 = por %p132, %p133
      %p135 = scmp.ne.s32.totalorder %s124, %s125
      %p136 = scmp.eq.s32.totalorder %s20, 0
      %p137 = por %p135, %p136
      %p138 = scmp.ne.s32.totalorder %s124, %s125
      %p139 = scmp.eq.s32.totalorder %s21, 1
      %p140 = por %p138, %p139
      %p142 = scmp.ne.s32.totalorder %s125, %s141
      %p143 = scmp.eq.s32.totalorder %s21, 0
      %p144 = por %p142, %p143
      %p145 = scmp.le.s32.totalorder 1, %s15
      %p146 = scmp.lt.s32.totalorder %s15, 3
      %p147 = pnand %p145, %p146
      %p148 = pneg %p147
      // Predicated region
      $region9: #{tpu_custom_call.1} parent=5 // pred_check
        _
      $region10: #{tpu_custom_call.1} parent=5 // pred_check_branch
        %150 = sbr.rel (%p147) target = $region12
      $region11: #{tpu_custom_call.1} parent=5 // pred_region
        %s151 = ssub.s32 %s15, 1
      $region12: #{tpu_custom_call.1} parent=5 // pred_fallthru
        _
      %p152 = scmp.lt.s32.totalorder %s15, 2
      // Predicated region
      $region13: #{tpu_custom_call.1} parent=5 // pred_check
        %p153 = pneg %p152
      $region14: #{tpu_custom_call.1} parent=5 // pred_check_branch
        %155 = sbr.rel (%p153) target = $region16
      $region15: #{tpu_custom_call.1} parent=5 // pred_region
        // Predicated region
        $region17: #{tpu_custom_call.1} parent=15 // pred_check
          %p156 = pneg %p49
        $region18: #{tpu_custom_call.1} parent=15 // pred_check_branch
          %158 = sbr.rel (%p156) target = $region20
        $region19: #{tpu_custom_call.1} parent=15 // pred_region
          %s159 = sand.u32 %s39, 1
          %s160 = scalar_lea.sflag [#allocation3], %s159
          %s161 = sand.u32 %s39, 1
          %s162 = smul.addr %s161, 2
          %s163 = scalar_lea.vmem [#allocation2], %s162
          %s164 = sadd.s32 %s22, %s23
          %s166 = ssub.s32 32, 32
          %167 = vsyncadd %s160, %s166
          %s168 = smul.addr %s164, 32
          %s169 = scalar_lea.hbm %s0, %s168
          %s171 = sshll.u32 %s163, 4
          %s172 = int_to_ptr.vmem [resolvable:$true] %s171
          %174 = dma.hbm_to_vmem [thread:$0]  %s169, 32, %s172, %s160
        $region20: #{tpu_custom_call.1} parent=15 // pred_fallthru
          _
        // Predicated region
        $region21: #{tpu_custom_call.1} parent=15 // pred_check
          %p175 = pneg %p77
        $region22: #{tpu_custom_call.1} parent=15 // pred_check_branch
          %177 = sbr.rel (%p175) target = $region24
        $region23: #{tpu_custom_call.1} parent=15 // pred_region
          %s178 = sadd.s32 %s22, %s23
          %p179 = scmp.lt.s32.totalorder %s178, 1
          %s180 = scalar_select %p179, %s178, 1
          %s181 = scalar_lea.vmem %s1, %s180
          %s182 = sadd.s32 %s22, %s23
        $region24: #{tpu_custom_call.1} parent=15 // pred_fallthru
          _
        // Predicated region
        $region25: #{tpu_custom_call.1} parent=15 // pred_check
          %p183 = pneg %p105
        $region26: #{tpu_custom_call.1} parent=15 // pred_check_branch
          %185 = sbr.rel (%p183) target = $region28
        $region27: #{tpu_custom_call.1} parent=15 // pred_region
          %s186 = sadd.s32 %s22, %s23
          %p187 = scmp.lt.s32.totalorder %s186, 1
          %s188 = scalar_select %p187, %s186, 1
          %s189 = scalar_lea.vmem %s2, %s188
          %s190 = sadd.s32 %s22, %s23
        $region28: #{tpu_custom_call.1} parent=15 // pred_fallthru
          _
      $region16: #{tpu_custom_call.1} parent=5 // pred_fallthru
        _
      %p191 = scmp.le.s32.totalorder 1, %s15
      %p192 = scmp.lt.s32.totalorder %s15, 3
      %p193 = pnand %p191, %p192
      %p194 = pneg %p193
      // Predicated region
      $region29: #{tpu_custom_call.1} parent=5 // pred_check
        _
      $region30: #{tpu_custom_call.1} parent=5 // pred_check_branch
        %196 = sbr.rel (%p193) target = $region32
      $region31: #{tpu_custom_call.1} parent=5 // pred_region
        %s197 = ssub.s32 %s15, 1
        %s198 = sand.u32 %s42, 1
        %s199 = scalar_lea.sflag [#allocation3], %s198
        %s200 = sand.u32 %s42, 1
        %s201 = smul.addr %s200, 2
        %s202 = scalar_lea.vmem [#allocation2], %s201
        // Predicated region
        $region33: #{tpu_custom_call.1} parent=31 // pred_check
          %p203 = pneg %p55
        $region34: #{tpu_custom_call.1} parent=31 // pred_check_branch
          %205 = sbr.rel (%p203) target = $region36
        $region35: #{tpu_custom_call.1} parent=31 // pred_region
          %206 = dma.done %s199, 32
        $region36: #{tpu_custom_call.1} parent=31 // pred_fallthru
          _
        %s207 = sand.u32 %s42, 1
        %s208 = scalar_lea.sflag [#allocation3], %s207
        %s209 = sand.u32 %s42, 1
        %s210 = smul.addr %s209, 2
        %s211 = scalar_lea.vmem [#allocation2], %s210
        %p212 = pneg %p55
        %p213 = pneg %p52
        %s214 = sadd.s32 %s24, %s25
        %p215 = scmp.lt.s32.totalorder %s214, 1
        %s216 = scalar_select %p215, %s214, 1
        %s217 = scalar_lea.vmem %s1, %s216
        %p218 = pneg %p83
        %p219 = pneg %p80
        %s220 = sadd.s32 %s24, %s25
        %p221 = scmp.lt.s32.totalorder %s220, 1
        %s222 = scalar_select %p221, %s220, 1
        %s223 = scalar_lea.vmem %s2, %s222
        %p224 = pneg %p111
        %p225 = pneg %p108
        %p226 = pneg %p137
        %p227 = pneg %p134
        %s228 = sand.u32 %s124, 1
        %s229 = scalar_lea.sflag [#allocation4], %s228
        %s230 = sand.u32 %s124, 1
        %s231 = smul.addr %s230, 8
        %s232 = scalar_lea.vmem [#allocation5], %s231
        %s233 = sadd.s32 %s24, %s25
        %s234 = sadd.s32 %s24, %s25
        %p235 = scmp.lt.s32.totalorder %s234, 1
        %s236 = scalar_select %p235, %s234, 1
        %s237 = scalar_lea.vmem %s1, %s236
        %s238 = sadd.s32 %s24, %s25
        %s239 = sadd.s32 %s24, %s25
        %p240 = scmp.lt.s32.totalorder %s239, 1
        %s241 = scalar_select %p240, %s239, 1
        %s242 = scalar_lea.vmem %s2, %s241
        %s243 = sadd.s32 %s24, %s25
        %p244 = scmp.eq.s32.totalorder %s25, 0
        // Predicated region
        $region37: #{tpu_custom_call.1} parent=31 // pred_check
          %p245 = pneg %p244
        $region38: #{tpu_custom_call.1} parent=31 // pred_check_branch
          %247 = sbr.rel (%p245) target = $region40
        $region39: #{tpu_custom_call.1} parent=31 // pred_region
          %248 = vst [vmem:[%s232] sm:$0xff] 0.0
        $region40: #{tpu_custom_call.1} parent=31 // pred_fallthru
          _
        %v249 = vld [vmem:[%s202] sm:$0x3]
        %v250 = vld [vmem:[%s237] sm:$0x1]
        %v251 = vld [vmem:[%s242] sm:$0x1]
        %vm252 = vcmask 1041408
        %v253 = vsel %vm252, %v249, -inf
        %v254 = vrot.slane %v253, 4
        %v255 = vmax.f32 %v253, %v254
        %v256 = vrot.slane %v255, 2
        %v257 = vmax.f32 %v255, %v256
        %v258 = vrot.slane %v257, 1
        %v259 = vmax.f32 %v257, %v258
        %v260 = vsub.f32 %v249, %v259
        %v261 = vmul.f32 %v260, 1.442695
        %v262 = vpow.pop %v261
        %v263 = vsel %vm252, %v262, 0.0
        %v264 = vrot.slane %v263, 4
        %v265 = vadd.f32 %v263, %v264
        %v266 = vrot.slane %v265, 2
        %v267 = vadd.f32 %v265, %v266
        %v268 = vrot.slane %v267, 1
        %v269 = vadd.f32 %v267, %v268
        %v270 = vlog2.pop %v269
        %v271 = vmul.f32 %v270, 0.6931472
        %v272 = vadd.f32 %v259, %v271
        %v273 = vlaneseq
        %v274 = vshrl.u32 %v273, 7
        %v275 = vlaneseq
        %v276 = vshrl.u32 %v275, 7
        %v277 = vsub.s32 0, %v276
        %v278 = vrot.slane %v250, %v277
        %vm279 = vcmp.eq.s32.totalorder %v274, %v278
        %v280 = vsel %vm279, 1, 0
        %v281 = vcvt.s32.f32 %v280
        %v282 = vmul.f32 %v249, %v281
        %v283 = vsel %vm252, %v282, 0.0
        %v284 = vrot.slane %v283, 4
        %v285 = vadd.f32 %v283, %v284
        %v286 = vrot.slane %v285, 2
        %v287 = vadd.f32 %v285, %v286
        %v288 = vrot.slane %v287, 1
        %v289 = vadd.f32 %v287, %v288
        %v290 = vsub.f32 %v272, %v289
        %v291 = vsub.f32 0.0, %v290
        %v292 = vmul.f32 %v291, 1.442695
        %v293 = vpow.pop %v292
        %v294 = vsub.f32 1.0, %v293
        %v295 = vmul.f32 %v294, %v294
        %v296 = vmul.f32 %v251, %v295
        %v297 = vmul.f32 %v296, %v290
        %v298 = vld [vmem:[%s232] sm:$0xff]
        %v300 = vlaneseq
        %v301 = vshrl.u32 %v300, 7
        %v302 = vsub.s32 0, %v301
        %v303 = vrot.slane %v297, %v302
        %v305 = vadd.f32 %v298, %v303
        %306 = vst [vmem:[%s232] sm:$0xff] %v305
        %s307 = sand.u32 %s124, 1
        %s308 = scalar_lea.sflag [#allocation4], %s307
        %s309 = sand.u32 %s124, 1
        %s310 = smul.addr %s309, 8
        %s311 = scalar_lea.vmem [#allocation5], %s310
        // Predicated region
        $region41: #{tpu_custom_call.1} parent=31 // pred_check
          %p312 = pneg %p134
        $region42: #{tpu_custom_call.1} parent=31 // pred_check_branch
          %314 = sbr.rel (%p312) target = $region44
        $region43: #{tpu_custom_call.1} parent=31 // pred_region
          %s316 = ssub.s32 128, 128
          %317 = vsyncadd %s308, %s316
          %s318 = smul.addr %s24, 128
          %s319 = scalar_lea.hbm %s3, %s318
          %s321 = sshll.u32 %s311, 4
          %s322 = int_to_ptr.vmem [resolvable:$true] %s321
          %324 = dma.vmem_to_hbm [thread:$0]  %s322, 128, %s319, %s308
        $region44: #{tpu_custom_call.1} parent=31 // pred_fallthru
          _
      $region32: #{tpu_custom_call.1} parent=5 // pred_fallthru
        _
      %p325 = scmp.le.s32.totalorder 2, %s15
      // Predicated region
      $region45: #{tpu_custom_call.1} parent=5 // pred_check
        %p326 = pneg %p325
      $region46: #{tpu_custom_call.1} parent=5 // pred_check_branch
        %328 = sbr.rel (%p326) target = $region48
      $region47: #{tpu_custom_call.1} parent=5 // pred_region
        %s329 = ssub.s32 %s15, 2
        // Predicated region
        $region49: #{tpu_custom_call.1} parent=47 // pred_check
          %p330 = pneg %p140
        $region50: #{tpu_custom_call.1} parent=47 // pred_check_branch
          %332 = sbr.rel (%p330) target = $region52
        $region51: #{tpu_custom_call.1} parent=47 // pred_region
          %s333 = sand.u32 %s125, 1
          %s334 = scalar_lea.sflag [#allocation4], %s333
          %s335 = sand.u32 %s125, 1
          %s336 = smul.addr %s335, 8
          %s337 = scalar_lea.vmem [#allocation5], %s336
          %338 = dma.done %s334, 128
        $region52: #{tpu_custom_call.1} parent=47 // pred_fallthru
          _
      $region48: #{tpu_custom_call.1} parent=5 // pred_fallthru
        _
    $region6: #{tpu_custom_call.1} parent=1 // loop_footer
      %s19 = sadd.s32 1, %s15
    $region7: #{tpu_custom_call.1} parent=1 // loop_footer_branch
      %14 = sbr.rel target = $region3
    $region8: #{tpu_custom_call.1} parent=1 // loop_exit
      _
    %339 = vsyncpa [#allocation3], 1
    %s340 = scalar_lea.sflag [#allocation3], 1
    %341 = vsyncpa %s340, 1
    %342 = vsyncpa [#allocation4], 1
    %s343 = scalar_lea.sflag [#allocation4], 1
    %344 = vsyncpa %s343, 1

</llo_original>
